<compile_context>
chip_gen: v6e
topology: v6e:2x2x1
jax: 0.10.0
libtpu: 0.0.40
codegen_flags: <defaults>
</compile_context>

<pallas_src>
import functools

import jax
import jax.numpy as jnp
from jax import lax
from jax.experimental import pallas as pl
from jax.experimental.pallas import tpu as pltpu


# --------------------------------------------------------------------------
# Pallas kernels
# --------------------------------------------------------------------------
def _joint_and_logits_kernel(patches_ref, w1s_ref, shift_ref, w2blk_ref,
                             seg_ref, ones_ref, b2_ref, out_ref):
    """bcondition=True path (one batch tile of TB elements).

    patches: (TB*16, Kpad)   im2col of concat(h_code, c_code), K zero-padded to 128n
    w1s:     (Kpad, Cout)    3x3 conv weight with eval-BN scale folded in
    shift:   (1, Cout)       folded BatchNorm shift
    w2blk:   (TB*16, Cout)   4x4 conv weight, tiled over the batch *tile* only
    seg:     (TB, TB*16)     ones-block matrix: sums 16 rows per batch element
    ones:    (Cout, 1)       lane-sum vector (MXU matvec instead of XLU reduce)
    b2:      (1, 1)          bias of the 1-channel output conv
    out:     (TB, 1)         sigmoid(logits)
    """
    # 3x3 conv as a single MXU matmul, f32 accumulation.
    h = jnp.dot(patches_ref[...], w1s_ref[...],
                preferred_element_type=jnp.float32)
    # eval-mode BatchNorm (scale already folded into w1s) + LeakyReLU(0.2).
    h = h + shift_ref[...]
    h = jnp.where(h >= 0.0, h, 0.2 * h)
    # Conv2d(Cout -> 1, kernel=4, stride=4) on a 4x4 map == weighted full
    # reduction per batch element: elementwise mul + two tiny MXU matmuls.
    t = h * w2blk_ref[...]                                        # (TB*16, Cout)
    rowdot = jnp.dot(t, ones_ref[...],
                     preferred_element_type=jnp.float32)          # (TB*16, 1)
    logits = jnp.dot(seg_ref[...], rowdot,
                     preferred_element_type=jnp.float32)          # (TB, 1)
    out_ref[...] = jax.nn.sigmoid(logits + b2_ref[...])


def _logits_only_kernel(h2_ref, w2f_ref, b2_ref, out_ref):
    """bcondition=False path: the whole 4x4/stride-4 conv is one MXU matmul.

    h2:  (TB, 16*Cout)  h_code, NHWC-flattened per batch element (host-side)
    w2f: (16*Cout, 1)   flattened 4x4 conv weight
    b2:  (1, 1)         bias
    out: (TB, 1)        sigmoid(logits)
    """
    logits = jnp.dot(h2_ref[...], w2f_ref[...],
                     preferred_element_type=jnp.float32)          # (TB, 1)
    out_ref[...] = jax.nn.sigmoid(logits + b2_ref[...])


# --------------------------------------------------------------------------
# Glue: im2col, weight reshaping, wrappers
# --------------------------------------------------------------------------
def _im2col_3x3(x_nhwc):
    """(B, H, W, C) -> (B*H*W, 9*C); row = b*H*W + i*W + j, col = (ki*3+kj)*C + c."""
    B, H, W, C = x_nhwc.shape
    xp = jnp.pad(x_nhwc, ((0, 0), (1, 1), (1, 1), (0, 0)))
    cols = [xp[:, ki:ki + H, kj:kj + W, :] for ki in range(3) for kj in range(3)]
    patches = jnp.stack(cols, axis=3)                   # (B, H, W, 9, C)
    return patches.reshape(B * H * W, 9 * C)


def _round_up(x, m):
    return (x + m - 1) // m * m


def _batch_tile(B):
    # TB=8 keeps (TB*16, .) blocks (8,128)-aligned and the grid pipelined;
    # otherwise fall back to a single full-batch block (still valid BlockSpecs).
    return 8 if B % 8 == 0 else B


def init_params(key, ndf, nef, bcondition):
    Cout = ndf * 8
    Cin = Cout + nef
    ks = jax.random.split(key, 6)
    params = {}
    if bcondition:
        params["w1"] = 0.05 * jax.random.normal(ks[0], (Cout, Cin, 3, 3), jnp.float32)
        params["bn_gamma"] = 1.0 + 0.1 * jax.random.normal(ks[1], (Cout,), jnp.float32)
        params["bn_beta"] = 0.1 * jax.random.normal(ks[2], (Cout,), jnp.float32)
        params["bn_mean"] = jnp.zeros((Cout,), jnp.float32)   # PyTorch default running stats
        params["bn_var"] = jnp.ones((Cout,), jnp.float32)
    params["w2"] = 0.05 * jax.random.normal(ks[3], (1, Cout, 4, 4), jnp.float32)
    params["b2"] = 0.1 * jax.random.normal(ks[4], (1,), jnp.float32)
    return params


@functools.partial(jax.jit,
                   static_argnames=("ndf", "nef", "bcondition", "mxu_dtype"))
def d_get_logits_forward(params, h_code, c_code, *, ndf, nef, bcondition,
                         mxu_dtype=jnp.bfloat16):
    """h_code: (B, ndf*8, 4, 4) NCHW (PyTorch convention); c_code: (B, nef)."""
    B = h_code.shape[0]
    Cout = ndf * 8
    H = W = 4
    eps = 1e-5
    TB = _batch_tile(B)
    grid = (B // TB,)

    # second-conv weight:  w2_mat[i*4 + j, c] = w2[0, c, i, j]
    w2_mat = jnp.transpose(params["w2"][0], (1, 2, 0)).reshape(H * W, Cout)
    w2_mat = w2_mat.astype(jnp.float32)
    b2 = params["b2"].reshape(1, 1).astype(jnp.float32)

    cparams = pltpu.CompilerParams(dimension_semantics=("parallel",))

    if bcondition:
        Cin = Cout + nef
        # c_code.view(-1, nef, 1, 1).repeat(1, 1, 4, 4); cat along channels.
        cc = jnp.broadcast_to(c_code[:, :, None, None], (B, nef, H, W))
        x = jnp.concatenate([h_code, cc], axis=1)                 # (B, Cin, 4, 4) NCHW
        x_nhwc = jnp.transpose(x, (0, 2, 3, 1))
        patches = _im2col_3x3(x_nhwc)                             # (B*16, 9*Cin)

        K = 9 * Cin
        Kpad = _round_up(K, 128)        # clean unmasked lane tiles on the MXU
        patches = jnp.pad(patches, ((0, 0), (0, Kpad - K)))

        # weight (Cout, Cin, 3, 3) -> (9*Cin, Cout); fold eval-BN scale into it.
        w1_mat = jnp.transpose(params["w1"], (2, 3, 1, 0)).reshape(K, Cout)
        inv_std = params["bn_gamma"] / jnp.sqrt(params["bn_var"] + eps)
        w1s = jnp.pad(w1_mat * inv_std[None, :], ((0, Kpad - K), (0, 0)))
        shift = (params["bn_beta"] - params["bn_mean"] * inv_std).reshape(1, Cout)
        shift = shift.astype(jnp.float32)

        # MXU operands in bf16 (halves DMA/VMEM bytes); accumulation stays f32.
        patches = patches.astype(mxu_dtype)
        w1s = w1s.astype(mxu_dtype)

        # constants, sized per batch *tile* (not per full batch), reused by
        # every grid step (index_map -> (0, 0) => no re-DMA).
        w2blk = jnp.tile(w2_mat, (TB, 1))                         # (TB*16, Cout)
        seg = jnp.kron(jnp.eye(TB, dtype=jnp.float32),
                       jnp.ones((1, H * W), jnp.float32))         # (TB, TB*16)
        ones_c = jnp.ones((Cout, 1), jnp.float32)

        out = pl.pallas_call(
            _joint_and_logits_kernel,
            out_shape=jax.ShapeDtypeStruct((B, 1), jnp.float32),
            grid=grid,
            in_specs=[
                pl.BlockSpec((TB * H * W, Kpad), lambda i: (i, 0)),   # patches
                pl.BlockSpec((Kpad, Cout), lambda i: (0, 0)),         # w1s
                pl.BlockSpec((1, Cout), lambda i: (0, 0)),            # shift
                pl.BlockSpec((TB * H * W, Cout), lambda i: (0, 0)),   # w2blk
                pl.BlockSpec((TB, TB * H * W), lambda i: (0, 0)),     # seg
                pl.BlockSpec((Cout, 1), lambda i: (0, 0)),            # ones
                pl.BlockSpec((1, 1), lambda i: (0, 0)),               # b2
            ],
            out_specs=pl.BlockSpec((TB, 1), lambda i: (i, 0)),
            compiler_params=cparams,
        )(patches, w1s, shift, w2blk, seg, ones_c, b2)
    else:
        # The whole head is a single matmul: (B, 16*Cout) @ (16*Cout, 1).
        h2 = jnp.transpose(h_code, (0, 2, 3, 1)).reshape(B, H * W * Cout)
        w2f = w2_mat.reshape(H * W * Cout, 1)
        h2 = h2.astype(mxu_dtype)
        w2f = w2f.astype(mxu_dtype)

        out = pl.pallas_call(
            _logits_only_kernel,
            out_shape=jax.ShapeDtypeStruct((B, 1), jnp.float32),
            grid=grid,
            in_specs=[
                pl.BlockSpec((TB, H * W * Cout), lambda i: (i, 0)),   # h2
                pl.BlockSpec((H * W * Cout, 1), lambda i: (0, 0)),    # w2f
                pl.BlockSpec((1, 1), lambda i: (0, 0)),               # b2
            ],
            out_specs=pl.BlockSpec((TB, 1), lambda i: (i, 0)),
            compiler_params=cparams,
        )(h2, w2f, b2)

    return out.reshape(-1)                                        # matches output.view(-1)


# --------------------------------------------------------------------------
# Pure-JAX reference (XLA convs, highest precision) for correctness checking
# --------------------------------------------------------------------------
def reference_forward(params, h_code, c_code, *, ndf, nef, bcondition):
    eps = 1e-5
    x = h_code
    if bcondition:
        B = h_code.shape[0]
        cc = jnp.broadcast_to(c_code[:, :, None, None], (B, nef, 4, 4))
        x = jnp.concatenate([h_code, cc], axis=1)
        y = lax.conv_general_dilated(x, params["w1"], (1, 1), ((1, 1), (1, 1)),
                                     dimension_numbers=("NCHW", "OIHW", "NCHW"),
                                     precision=lax.Precision.HIGHEST)
        g = params["bn_gamma"][None, :, None, None]
        b = params["bn_beta"][None, :, None, None]
        m = params["bn_mean"][None, :, None, None]
        v = params["bn_var"][None, :, None, None]
        y = g * (y - m) / jnp.sqrt(v + eps) + b
        x = jnp.where(y >= 0.0, y, 0.2 * y)
    z = lax.conv_general_dilated(x, params["w2"], (4, 4), "VALID",
                                 dimension_numbers=("NCHW", "OIHW", "NCHW"),
                                 precision=lax.Precision.HIGHEST)
    z = z + params["b2"][None, :, None, None]
    return jax.nn.sigmoid(z).reshape(-1)


# --------------------------------------------------------------------------
if __name__ == "__main__":
    ndf, nef = 8, 16                       # ndf*8 = 64 channels, 4x4 spatial
    key = jax.random.PRNGKey(0)
    k_h, k_c, k_p = jax.random.split(key, 3)

    ok = True
    for B in (2, 16):                      # B=16 exercises the batch grid (TB=8, 2 steps)
        kh = jax.random.fold_in(k_h, B)
        kc = jax.random.fold_in(k_c, B)
        h_code = jax.random.normal(kh, (B, ndf * 8, 4, 4), jnp.float32)
        c_code = jax.random.normal(kc, (B, nef), jnp.float32)
        for bcondition in (True, False):
            params = init_params(k_p, ndf, nef, bcondition)
            ref = reference_forward(params, h_code, c_code,
                                    ndf=ndf, nef=nef, bcondition=bcondition)
            for mxu_dtype, atol in ((jnp.float32, 5e-3), (jnp.bfloat16, 5e-2)):
                out = d_get_logits_forward(params, h_code, c_code,
                                           ndf=ndf, nef=nef,
                                           bcondition=bcondition,
                                           mxu_dtype=mxu_dtype)
                out = jax.block_until_ready(out)
                if out.shape != (B,) or not bool(jnp.allclose(out, ref, atol=atol)):
                    ok = False

    if ok:
        print("KERNEL_OK")
</pallas_src>

<mosaic_0001>
module attributes {stable_mosaic.version = 11 : i64} {
  func.func @_joint_and_logits_kernel(%arg0: i32, %arg1: memref<32x768xf32, #tpu.memory_space<vmem>>, %arg2: memref<768x64xf32, #tpu.memory_space<vmem>>, %arg3: memref<1x64xf32, #tpu.memory_space<vmem>>, %arg4: memref<32x64xf32, #tpu.memory_space<vmem>>, %arg5: memref<2x32xf32, #tpu.memory_space<vmem>>, %arg6: memref<64x1xf32, #tpu.memory_space<vmem>>, %arg7: memref<1x1xf32, #tpu.memory_space<vmem>>, %arg8: memref<2x1xf32, #tpu.memory_space<vmem>>) attributes {dimension_semantics = [#tpu.dimension_semantics<parallel>], iteration_bounds = array<i64: 1>, scalar_prefetch = 0 : i64, scratch_operands = 0 : i64, tpu.core_type = #tpu.core_type<tc>, window_params = [{transform_indices = @transform_0, window_bounds = array<i64: 32, 768>}, {pipeline_mode = #tpu.pipeline_mode<synchronous>, transform_indices = @transform_1, window_bounds = array<i64: 768, 64>}, {pipeline_mode = #tpu.pipeline_mode<synchronous>, transform_indices = @transform_2, window_bounds = array<i64: 1, 64>}, {pipeline_mode = #tpu.pipeline_mode<synchronous>, transform_indices = @transform_3, window_bounds = array<i64: 32, 64>}, {pipeline_mode = #tpu.pipeline_mode<synchronous>, transform_indices = @transform_4, window_bounds = array<i64: 2, 32>}, {pipeline_mode = #tpu.pipeline_mode<synchronous>, transform_indices = @transform_5, window_bounds = array<i64: 64, 1>}, {pipeline_mode = #tpu.pipeline_mode<synchronous>, transform_indices = @transform_6, window_bounds = array<i64: 1, 1>}, {transform_indices = @transform_7, window_bounds = array<i64: 2, 1>}]} {
    %c0 = arith.constant 0 : index
    %c0_0 = arith.constant 0 : index
    %0 = vector.load %arg1[%c0, %c0_0] : memref<32x768xf32, #tpu.memory_space<vmem>>, vector<32x768xf32>
    %c0_1 = arith.constant 0 : index
    %c0_2 = arith.constant 0 : index
    %1 = vector.load %arg2[%c0_1, %c0_2] : memref<768x64xf32, #tpu.memory_space<vmem>>, vector<768x64xf32>
    %cst = arith.constant dense<0.000000e+00> : vector<32x64xf32>
    %2 = tpu.matmul %0, %1, %cst {dimension_numbers = #tpu.dot_dimension_numbers<[1], [0], [0], [1], [0, 0, 1, 1], [], []>} : vector<32x768xf32>, vector<768x64xf32>, vector<32x64xf32> -> vector<32x64xf32>
    %c0_3 = arith.constant 0 : index
    %c0_4 = arith.constant 0 : index
    %3 = vector.load %arg3[%c0_3, %c0_4] : memref<1x64xf32, #tpu.memory_space<vmem>>, vector<1x64xf32>
    %4 = vector.broadcast %3 : vector<1x64xf32> to vector<32x64xf32>
    %5 = arith.addf %2, %4 : vector<32x64xf32>
    %cst_5 = arith.constant 0.000000e+00 : f32
    %6 = vector.broadcast %cst_5 : f32 to vector<32x64xf32>
    %7 = arith.cmpf oge, %5, %6 : vector<32x64xf32>
    %cst_6 = arith.constant 2.000000e-01 : f32
    %8 = vector.broadcast %cst_6 : f32 to vector<32x64xf32>
    %9 = arith.mulf %8, %5 : vector<32x64xf32>
    %10 = arith.select %7, %5, %9 : vector<32x64xi1>, vector<32x64xf32>
    %c0_7 = arith.constant 0 : index
    %c0_8 = arith.constant 0 : index
    %11 = vector.load %arg4[%c0_7, %c0_8] : memref<32x64xf32, #tpu.memory_space<vmem>>, vector<32x64xf32>
    %12 = arith.mulf %10, %11 : vector<32x64xf32>
    %c0_9 = arith.constant 0 : index
    %c0_10 = arith.constant 0 : index
    %13 = vector.load %arg6[%c0_9, %c0_10] : memref<64x1xf32, #tpu.memory_space<vmem>>, vector<64x1xf32>
    %cst_11 = arith.constant dense<0.000000e+00> : vector<32x1xf32>
    %14 = tpu.matmul %12, %13, %cst_11 {dimension_numbers = #tpu.dot_dimension_numbers<[1], [0], [0], [1], [0, 0, 1, 1], [], []>} : vector<32x64xf32>, vector<64x1xf32>, vector<32x1xf32> -> vector<32x1xf32>
    %c0_12 = arith.constant 0 : index
    %c0_13 = arith.constant 0 : index
    %15 = vector.load %arg5[%c0_12, %c0_13] : memref<2x32xf32, #tpu.memory_space<vmem>>, vector<2x32xf32>
    %cst_14 = arith.constant dense<0.000000e+00> : vector<2x1xf32>
    %16 = tpu.matmul %15, %14, %cst_14 {dimension_numbers = #tpu.dot_dimension_numbers<[1], [0], [0], [1], [0, 0, 1, 1], [], []>} : vector<2x32xf32>, vector<32x1xf32>, vector<2x1xf32> -> vector<2x1xf32>
    %c0_15 = arith.constant 0 : index
    %c0_16 = arith.constant 0 : index
    %17 = vector.load %arg7[%c0_15, %c0_16] : memref<1x1xf32, #tpu.memory_space<vmem>>, vector<1x1xf32>
    %18 = vector.broadcast %17 : vector<1x1xf32> to vector<2x1xf32>
    %19 = arith.addf %16, %18 : vector<2x1xf32>
    %20 = arith.negf %19 : vector<2x1xf32>
    %21 = math.exp %20 : vector<2x1xf32>
    %cst_17 = arith.constant 1.000000e+00 : f32
    %22 = vector.broadcast %cst_17 : f32 to vector<2x1xf32>
    %23 = arith.addf %22, %21 : vector<2x1xf32>
    %24 = arith.divf %22, %23 : vector<2x1xf32>
    %c0_18 = arith.constant 0 : index
    %c0_19 = arith.constant 0 : index
    %25 = vector.load %arg8[%c0_18, %c0_19] : memref<2x1xf32, #tpu.memory_space<vmem>>, vector<2x1xf32>
    tpu.vector_store %arg8[%c0_18, %c0_19], %24 {strides = array<i32>} : memref<2x1xf32, #tpu.memory_space<vmem>>, vector<2x1xf32>,
    return
  }
  func.func @transform_0(%arg0: i32) -> (i32, i32) {
    %c0_i32 = arith.constant 0 : i32
    %c0_i32_0 = arith.constant 0 : i32
    return %arg0, %c0_i32 : i32, i32
  }
  func.func @transform_1(%arg0: i32) -> (i32, i32) {
    %c0_i32 = arith.constant 0 : i32
    %c0_i32_0 = arith.constant 0 : i32
    %c0_i32_1 = arith.constant 0 : i32
    return %c0_i32, %c0_i32_0 : i32, i32
  }
  func.func @transform_2(%arg0: i32) -> (i32, i32) {
    %c0_i32 = arith.constant 0 : i32
    %c0_i32_0 = arith.constant 0 : i32
    %c0_i32_1 = arith.constant 0 : i32
    return %c0_i32, %c0_i32_0 : i32, i32
  }
  func.func @transform_3(%arg0: i32) -> (i32, i32) {
    %c0_i32 = arith.constant 0 : i32
    %c0_i32_0 = arith.constant 0 : i32
    %c0_i32_1 = arith.constant 0 : i32
    return %c0_i32, %c0_i32_0 : i32, i32
  }
  func.func @transform_4(%arg0: i32) -> (i32, i32) {
    %c0_i32 = arith.constant 0 : i32
    %c0_i32_0 = arith.constant 0 : i32
    %c0_i32_1 = arith.constant 0 : i32
    return %c0_i32, %c0_i32_0 : i32, i32
  }
  func.func @transform_5(%arg0: i32) -> (i32, i32) {
    %c0_i32 = arith.constant 0 : i32
    %c0_i32_0 = arith.constant 0 : i32
    %c0_i32_1 = arith.constant 0 : i32
    return %c0_i32, %c0_i32_0 : i32, i32
  }
  func.func @transform_6(%arg0: i32) -> (i32, i32) {
    %c0_i32 = arith.constant 0 : i32
    %c0_i32_0 = arith.constant 0 : i32
    %c0_i32_1 = arith.constant 0 : i32
    return %c0_i32, %c0_i32_0 : i32, i32
  }
  func.func @transform_7(%arg0: i32) -> (i32, i32) {
    %c0_i32 = arith.constant 0 : i32
    %c0_i32_0 = arith.constant 0 : i32
    return %arg0, %c0_i32 : i32, i32
  }
}

</mosaic_0001>

<llo_original>
// kernel: d_get_logits_forward.1
$region0: #{d_get_logits_forward.1}
  #allocation0 [shape = 'u32[]', space=smem, size = 0x4, offset = 0x4, fixed_abs, tag = 'smem constant byte address 0x4 - core index']
  #allocation1 [shape = 'u32[144,128]{1,0:T(1,128)}', space=vmem, size = 0x12000, scoped, tag = 'internal scratch']
  #allocation2 [shape = 'f32[1,1]{1,0:T(1,128)S(1)}', space=vmem, size = 0x200, scoped, tag = 'scoped memory for d_get_logits_forward.1']
  %s0 = inlined_call_operand.vmem [shape: f32[32,768], index: 0, kind: input, shape index: {}]
  %s1 = inlined_call_operand.vmem [shape: f32[768,64], index: 1, kind: input, shape index: {}]
  %s2 = inlined_call_operand.vmem [shape: f32[1,64], index: 2, kind: input, shape index: {}]
  %s3 = inlined_call_operand.vmem [shape: f32[32,64], index: 3, kind: input, shape index: {}]
  %s4 = inlined_call_operand.vmem [shape: f32[2,32], index: 4, kind: input, shape index: {}]
  %s5 = inlined_call_operand.vmem [shape: f32[64,1], index: 5, kind: input, shape index: {}]
  %s6 = inlined_call_operand.<no memory space> [shape: f32[1,1], index: 6, kind: input, shape index: {}]
  %s7 = inlined_call_operand.vmem [shape: f32[2,1], index: 7, kind: output, shape index: {}]
  %s8 = sld [smem:[#allocation0]]
  $region38: #{d_get_logits_forward.1} parent=0
    _
  %s10 = ssub.s32 1, %s8
  %s11 = scalar_select 0, %s10, %s8
  %v12 = vstv %s6
  %13 = vst [vmem:[#allocation2] sm:$0x1] %v12
  // Predicated region
  $region2: #{d_get_logits_forward.1} parent=0 // pred_check
    _
  $region3: #{d_get_logits_forward.1} parent=0 // pred_check_branch
    %15 = sbr.rel (0) target = $region5
  $region4: #{d_get_logits_forward.1} parent=0 // pred_region
    _
  $region5: #{d_get_logits_forward.1} parent=0 // pred_fallthru
    _
  // Predicated region
  $region6: #{d_get_logits_forward.1} parent=0 // pred_check
    _
  $region7: #{d_get_logits_forward.1} parent=0 // pred_check_branch
    %17 = sbr.rel (0) target = $region9
  $region8: #{d_get_logits_forward.1} parent=0 // pred_region
    _
  $region9: #{d_get_logits_forward.1} parent=0 // pred_fallthru
    _
  // Predicated region
  $region10: #{d_get_logits_forward.1} parent=0 // pred_check
    _
  $region11: #{d_get_logits_forward.1} parent=0 // pred_check_branch
    %19 = sbr.rel (0) target = $region13
  $region12: #{d_get_logits_forward.1} parent=0 // pred_region
    _
  $region13: #{d_get_logits_forward.1} parent=0 // pred_fallthru
    _
  // Predicated region
  $region14: #{d_get_logits_forward.1} parent=0 // pred_check
    _
  $region15: #{d_get_logits_forward.1} parent=0 // pred_check_branch
    %21 = sbr.rel (0) target = $region17
  $region16: #{d_get_logits_forward.1} parent=0 // pred_region
    _
  $region17: #{d_get_logits_forward.1} parent=0 // pred_fallthru
    _
  // Predicated region
  $region18: #{d_get_logits_forward.1} parent=0 // pred_check
    _
  $region19: #{d_get_logits_forward.1} parent=0 // pred_check_branch
    %23 = sbr.rel (0) target = $region21
  $region20: #{d_get_logits_forward.1} parent=0 // pred_region
    _
  $region21: #{d_get_logits_forward.1} parent=0 // pred_fallthru
    _
  // Predicated region
  $region22: #{d_get_logits_forward.1} parent=0 // pred_check
    _
  $region23: #{d_get_logits_forward.1} parent=0 // pred_check_branch
    %25 = sbr.rel (0) target = $region25
  $region24: #{d_get_logits_forward.1} parent=0 // pred_region
    _
  $region25: #{d_get_logits_forward.1} parent=0 // pred_fallthru
    _
  // Predicated region
  $region26: #{d_get_logits_forward.1} parent=0 // pred_check
    _
  $region27: #{d_get_logits_forward.1} parent=0 // pred_check_branch
    %27 = sbr.rel (0) target = $region29
  $region28: #{d_get_logits_forward.1} parent=0 // pred_region
    _
  $region29: #{d_get_logits_forward.1} parent=0 // pred_fallthru
    _
  %v28 = vld [vmem:[%s0] sm:$0xff]
  %v29 = vld [vmem:[%s0 + $0x8] sm:$0xff]
  %v30 = vld [vmem:[%s0 + $0x10] sm:$0xff]
  %v31 = vld [vmem:[%s0 + $0x18] sm:$0xff]
  %v32 = vld [vmem:[%s0 + $0x20] sm:$0xff]
  %v33 = vld [vmem:[%s0 + $0x28] sm:$0xff]
  %v34 = vld [vmem:[%s0 + $0x30] sm:$0xff]
  %v35 = vld [vmem:[%s0 + $0x38] sm:$0xff]
  %v36 = vld [vmem:[%s0 + $0x40] sm:$0xff]
  %v37 = vld [vmem:[%s0 + $0x48] sm:$0xff]
  %v38 = vld [vmem:[%s0 + $0x50] sm:$0xff]
  %v39 = vld [vmem:[%s0 + $0x58] sm:$0xff]
  %v40 = vld [vmem:[%s0 + $0x60] sm:$0xff]
  %v41 = vld [vmem:[%s0 + $0x68] sm:$0xff]
  %v42 = vld [vmem:[%s0 + $0x70] sm:$0xff]
  %v43 = vld [vmem:[%s0 + $0x78] sm:$0xff]
  %v44 = vld [vmem:[%s0 + $0x80] sm:$0xff]
  %v45 = vld [vmem:[%s0 + $0x88] sm:$0xff]
  %v46 = vld [vmem:[%s0 + $0x90] sm:$0xff]
  %v47 = vld [vmem:[%s0 + $0x98] sm:$0xff]
  %v48 = vld [vmem:[%s0 + $0xa0] sm:$0xff]
  %v49 = vld [vmem:[%s0 + $0xa8] sm:$0xff]
  %v50 = vld [vmem:[%s0 + $0xb0] sm:$0xff]
  %v51 = vld [vmem:[%s0 + $0xb8] sm:$0xff]
  %v52 = vld [vmem:[%s1] sm:$0xff]
  %v53 = vld [vmem:[%s1 + $0x8] sm:$0xff]
  %v54 = vld [vmem:[%s1 + $0x10] sm:$0xff]
  %v55 = vld [vmem:[%s1 + $0x18] sm:$0xff]
  %v56 = vld [vmem:[%s1 + $0x20] sm:$0xff]
  %v57 = vld [vmem:[%s1 + $0x28] sm:$0xff]
  %v58 = vld [vmem:[%s1 + $0x30] sm:$0xff]
  %v59 = vld [vmem:[%s1 + $0x38] sm:$0xff]
  %v60 = vld [vmem:[%s1 + $0x40] sm:$0xff]
  %v61 = vld [vmem:[%s1 + $0x48] sm:$0xff]
  %v62 = vld [vmem:[%s1 + $0x50] sm:$0xff]
  %v63 = vld [vmem:[%s1 + $0x58] sm:$0xff]
  %v64 = vld [vmem:[%s1 + $0x60] sm:$0xff]
  %v65 = vld [vmem:[%s1 + $0x68] sm:$0xff]
  %v66 = vld [vmem:[%s1 + $0x70] sm:$0xff]
  %v67 = vld [vmem:[%s1 + $0x78] sm:$0xff]
  %v68 = vld [vmem:[%s1 + $0x80] sm:$0xff]
  %v69 = vld [vmem:[%s1 + $0x88] sm:$0xff]
  %v70 = vld [vmem:[%s1 + $0x90] sm:$0xff]
  %v71 = vld [vmem:[%s1 + $0x98] sm:$0xff]
  %v72 = vld [vmem:[%s1 + $0xa0] sm:$0xff]
  %v73 = vld [vmem:[%s1 + $0xa8] sm:$0xff]
  %v74 = vld [vmem:[%s1 + $0xb0] sm:$0xff]
  %v75 = vld [vmem:[%s1 + $0xb8] sm:$0xff]
  %v76 = vld [vmem:[%s1 + $0xc0] sm:$0xff]
  %v77 = vld [vmem:[%s1 + $0xc8] sm:$0xff]
  %v78 = vld [vmem:[%s1 + $0xd0] sm:$0xff]
  %v79 = vld [vmem:[%s1 + $0xd8] sm:$0xff]
  %v80 = vld [vmem:[%s1 + $0xe0] sm:$0xff]
  %v81 = vld [vmem:[%s1 + $0xe8] sm:$0xff]
  %v82 = vld [vmem:[%s1 + $0xf0] sm:$0xff]
  %v83 = vld [vmem:[%s1 + $0xf8] sm:$0xff]
  %v84 = vld [vmem:[%s1 + $0x100] sm:$0xff]
  %v85 = vld [vmem:[%s1 + $0x108] sm:$0xff]
  %v86 = vld [vmem:[%s1 + $0x110] sm:$0xff]
  %v87 = vld [vmem:[%s1 + $0x118] sm:$0xff]
  %v88 = vld [vmem:[%s1 + $0x120] sm:$0xff]
  %v89 = vld [vmem:[%s1 + $0x128] sm:$0xff]
  %v90 = vld [vmem:[%s1 + $0x130] sm:$0xff]
  %v91 = vld [vmem:[%s1 + $0x138] sm:$0xff]
  %v92 = vld [vmem:[%s1 + $0x140] sm:$0xff]
  %v93 = vld [vmem:[%s1 + $0x148] sm:$0xff]
  %v94 = vld [vmem:[%s1 + $0x150] sm:$0xff]
  %v95 = vld [vmem:[%s1 + $0x158] sm:$0xff]
  %v96 = vld [vmem:[%s1 + $0x160] sm:$0xff]
  %v97 = vld [vmem:[%s1 + $0x168] sm:$0xff]
  %v98 = vld [vmem:[%s1 + $0x170] sm:$0xff]
  %v99 = vld [vmem:[%s1 + $0x178] sm:$0xff]
  %v100 = vld [vmem:[%s1 + $0x180] sm:$0xff]
  %v101 = vld [vmem:[%s1 + $0x188] sm:$0xff]
  %v102 = vld [vmem:[%s1 + $0x190] sm:$0xff]
  %v103 = vld [vmem:[%s1 + $0x198] sm:$0xff]
  %v104 = vld [vmem:[%s1 + $0x1a0] sm:$0xff]
  %v105 = vld [vmem:[%s1 + $0x1a8] sm:$0xff]
  %v106 = vld [vmem:[%s1 + $0x1b0] sm:$0xff]
  %v107 = vld [vmem:[%s1 + $0x1b8] sm:$0xff]
  %v108 = vld [vmem:[%s1 + $0x1c0] sm:$0xff]
  %v109 = vld [vmem:[%s1 + $0x1c8] sm:$0xff]
  %v110 = vld [vmem:[%s1 + $0x1d0] sm:$0xff]
  %v111 = vld [vmem:[%s1 + $0x1d8] sm:$0xff]
  %v112 = vld [vmem:[%s1 + $0x1e0] sm:$0xff]
  %v113 = vld [vmem:[%s1 + $0x1e8] sm:$0xff]
  %v114 = vld [vmem:[%s1 + $0x1f0] sm:$0xff]
  %v115 = vld [vmem:[%s1 + $0x1f8] sm:$0xff]
  %v116 = vld [vmem:[%s1 + $0x200] sm:$0xff]
  %v117 = vld [vmem:[%s1 + $0x208] sm:$0xff]
  %v118 = vld [vmem:[%s1 + $0x210] sm:$0xff]
  %v119 = vld [vmem:[%s1 + $0x218] sm:$0xff]
  %v120 = vld [vmem:[%s1 + $0x220] sm:$0xff]
  %v121 = vld [vmem:[%s1 + $0x228] sm:$0xff]
  %v122 = vld [vmem:[%s1 + $0x230] sm:$0xff]
  %v123 = vld [vmem:[%s1 + $0x238] sm:$0xff]
  %v124 = vld [vmem:[%s1 + $0x240] sm:$0xff]
  %v125 = vld [vmem:[%s1 + $0x248] sm:$0xff]
  %v126 = vld [vmem:[%s1 + $0x250] sm:$0xff]
  %v127 = vld [vmem:[%s1 + $0x258] sm:$0xff]
  %v128 = vld [vmem:[%s1 + $0x260] sm:$0xff]
  %v129 = vld [vmem:[%s1 + $0x268] sm:$0xff]
  %v130 = vld [vmem:[%s1 + $0x270] sm:$0xff]
  %v131 = vld [vmem:[%s1 + $0x278] sm:$0xff]
  %v132 = vld [vmem:[%s1 + $0x280] sm:$0xff]
  %v133 = vld [vmem:[%s1 + $0x288] sm:$0xff]
  %v134 = vld [vmem:[%s1 + $0x290] sm:$0xff]
  %v135 = vld [vmem:[%s1 + $0x298] sm:$0xff]
  %v136 = vld [vmem:[%s1 + $0x2a0] sm:$0xff]
  %v137 = vld [vmem:[%s1 + $0x2a8] sm:$0xff]
  %v138 = vld [vmem:[%s1 + $0x2b0] sm:$0xff]
  %v139 = vld [vmem:[%s1 + $0x2b8] sm:$0xff]
  %v140 = vld [vmem:[%s1 + $0x2c0] sm:$0xff]
  %v141 = vld [vmem:[%s1 + $0x2c8] sm:$0xff]
  %v142 = vld [vmem:[%s1 + $0x2d0] sm:$0xff]
  %v143 = vld [vmem:[%s1 + $0x2d8] sm:$0xff]
  %v144 = vld [vmem:[%s1 + $0x2e0] sm:$0xff]
  %v145 = vld [vmem:[%s1 + $0x2e8] sm:$0xff]
  %v146 = vld [vmem:[%s1 + $0x2f0] sm:$0xff]
  %v147 = vld [vmem:[%s1 + $0x2f8] sm:$0xff]
  %v148 = vld [vmem:[%s2] sm:$0x1]
  %v150 = vlaneseq
  %v151 = vshrl.u32 %v150, 7
  %v152 = vsub.s32 0, %v151
  %v153 = vrot.slane %v148, %v152
  %155 = vmatprep.subr.mxu0 0.0
  %156 = vmatpush1.msra.mxu0 %v67
  %157 = vmatprep.subr.mxu0 0.0
  %158 = vmatpush1.msra.mxu0 %v66
  %159 = vmatprep.subr.mxu0 0.0
  %160 = vmatpush1.msra.mxu0 %v65
  %161 = vmatprep.subr.mxu0 0.0
  %162 = vmatpush1.msra.mxu0 %v64
  %163 = vmatprep.subr.mxu0 0.0
  %164 = vmatpush1.msra.mxu0 %v63
  %165 = vmatprep.subr.mxu0 0.0
  %166 = vmatpush1.msra.mxu0 %v62
  %167 = vmatprep.subr.mxu0 0.0
  %168 = vmatpush1.msra.mxu0 %v61
  %169 = vmatprep.subr.mxu0 0.0
  %170 = vmatpush1.msra.mxu0 %v60
  %171 = vmatprep.subr.mxu0 0.0
  %172 = vmatpush1.msra.mxu0 %v59
  %173 = vmatprep.subr.mxu0 0.0
  %174 = vmatpush1.msra.mxu0 %v58
  %175 = vmatprep.subr.mxu0 0.0
  %176 = vmatpush1.msra.mxu0 %v57
  %177 = vmatprep.subr.mxu0 0.0
  %178 = vmatpush1.msra.mxu0 %v56
  %179 = vmatprep.subr.mxu0 0.0
  %180 = vmatpush1.msra.mxu0 %v55
  %181 = vmatprep.subr.mxu0 0.0
  %182 = vmatpush1.msra.mxu0 %v54
  %183 = vmatprep.subr.mxu0 0.0
  %184 = vmatpush1.msra.mxu0 %v53
  %185 = vmatprep.subr.mxu0 0.0
  %186 = vmatpush1.msra.mxu0 %v52
  %187 = vmatprep.subr.mxu0 0.0
  %188 = vmatpush2.msra.mxu0 %v83
  %189 = vmatprep.subr.mxu0 0.0
  %190 = vmatpush2.msra.mxu0 %v82
  %191 = vmatprep.subr.mxu0 0.0
  %192 = vmatpush2.msra.mxu0 %v81
  %193 = vmatprep.subr.mxu0 0.0
  %194 = vmatpush2.msra.mxu0 %v80
  %195 = vmatprep.subr.mxu0 0.0
  %196 = vmatpush2.msra.mxu0 %v79
  %197 = vmatprep.subr.mxu0 0.0
  %198 = vmatpush2.msra.mxu0 %v78
  %199 = vmatprep.subr.mxu0 0.0
  %200 = vmatpush2.msra.mxu0 %v77
  %201 = vmatprep.subr.mxu0 0.0
  %202 = vmatpush2.msra.mxu0 %v76
  %203 = vmatprep.subr.mxu0 0.0
  %204 = vmatpush2.msra.mxu0 %v75
  %205 = vmatprep.subr.mxu0 0.0
  %206 = vmatpush2.msra.mxu0 %v74
  %207 = vmatprep.subr.mxu0 0.0
  %208 = vmatpush2.msra.mxu0 %v73
  %209 = vmatprep.subr.mxu0 0.0
  %210 = vmatpush2.msra.mxu0 %v72
  %211 = vmatprep.subr.mxu0 0.0
  %212 = vmatpush2.msra.mxu0 %v71
  %213 = vmatprep.subr.mxu0 0.0
  %214 = vmatpush2.msra.mxu0 %v70
  %215 = vmatprep.subr.mxu0 0.0
  %216 = vmatpush2.msra.mxu0 %v69
  %217 = vmatprep.subr.mxu0 0.0
  %218 = vmatpush2.msra.mxu0 %v68
  %219 = vmatprep.mubr.f32.mxu0 %v29
  %220 = vmatmul.mubr.f32.gmra.mxu0 %v28
  %v221 = vpop.f32.mrf.mxu0
  %v222 = vadd.f32 %v153, %v221
  %v223 = vpop.f32.mrf.mxu0
  %224 = vmatprep.mubr.f32.mxu0 %v35
  %225 = vmatmul.mubr.f32.gmra.mxu0 %v34
  %v226 = vpop.f32.mrf.mxu0
  %v227 = vadd.f32 %v153, %v226
  %v228 = vpop.f32.mrf.mxu0
  %229 = vmatprep.mubr.f32.mxu0 %v41
  %230 = vmatmul.mubr.f32.gmra.mxu0 %v40
  %v231 = vpop.f32.mrf.mxu0
  %v232 = vadd.f32 %v153, %v231
  %v233 = vpop.f32.mrf.mxu0
  %234 = vmatprep.mubr.f32.mxu0 %v47
  %235 = vmatmul.mubr.f32.gmra.mxu0 %v46
  %v236 = vpop.f32.mrf.mxu0
  %v237 = vadd.f32 %v153, %v236
  %v238 = vpop.f32.mrf.mxu0
  %239 = vdwg.mxu0
  %240 = vmatprep.subr.mxu0 0.0
  %241 = vmatpush1.msra.mxu0 %v99
  %242 = vmatprep.subr.mxu0 0.0
  %243 = vmatpush1.msra.mxu0 %v98
  %244 = vmatprep.subr.mxu0 0.0
  %245 = vmatpush1.msra.mxu0 %v97
  %246 = vmatprep.subr.mxu0 0.0
  %247 = vmatpush1.msra.mxu0 %v96
  %248 = vmatprep.subr.mxu0 0.0
  %249 = vmatpush1.msra.mxu0 %v95
  %250 = vmatprep.subr.mxu0 0.0
  %251 = vmatpush1.msra.mxu0 %v94
  %252 = vmatprep.subr.mxu0 0.0
  %253 = vmatpush1.msra.mxu0 %v93
  %254 = vmatprep.subr.mxu0 0.0
  %255 = vmatpush1.msra.mxu0 %v92
  %256 = vmatprep.subr.mxu0 0.0
  %257 = vmatpush1.msra.mxu0 %v91
  %258 = vmatprep.subr.mxu0 0.0
  %259 = vmatpush1.msra.mxu0 %v90
  %260 = vmatprep.subr.mxu0 0.0
  %261 = vmatpush1.msra.mxu0 %v89
  %262 = vmatprep.subr.mxu0 0.0
  %263 = vmatpush1.msra.mxu0 %v88
  %264 = vmatprep.subr.mxu0 0.0
  %265 = vmatpush1.msra.mxu0 %v87
  %266 = vmatprep.subr.mxu0 0.0
  %267 = vmatpush1.msra.mxu0 %v86
  %268 = vmatprep.subr.mxu0 0.0
  %269 = vmatpush1.msra.mxu0 %v85
  %270 = vmatprep.subr.mxu0 0.0
  %271 = vmatpush1.msra.mxu0 %v84
  %272 = vmatprep.subr.mxu0 0.0
  %273 = vmatpush2.msra.mxu0 %v115
  %274 = vmatprep.subr.mxu0 0.0
  %275 = vmatpush2.msra.mxu0 %v114
  %276 = vmatprep.subr.mxu0 0.0
  %277 = vmatpush2.msra.mxu0 %v113
  %278 = vmatprep.subr.mxu0 0.0
  %279 = vmatpush2.msra.mxu0 %v112
  %280 = vmatprep.subr.mxu0 0.0
  %281 = vmatpush2.msra.mxu0 %v111
  %282 = vmatprep.subr.mxu0 0.0
  %283 = vmatpush2.msra.mxu0 %v110
  %284 = vmatprep.subr.mxu0 0.0
  %285 = vmatpush2.msra.mxu0 %v109
  %286 = vmatprep.subr.mxu0 0.0
  %287 = vmatpush2.msra.mxu0 %v108
  %288 = vmatprep.subr.mxu0 0.0
  %289 = vmatpush2.msra.mxu0 %v107
  %290 = vmatprep.subr.mxu0 0.0
  %291 = vmatpush2.msra.mxu0 %v106
  %292 = vmatprep.subr.mxu0 0.0
  %293 = vmatpush2.msra.mxu0 %v105
  %294 = vmatprep.subr.mxu0 0.0
  %295 = vmatpush2.msra.mxu0 %v104
  %296 = vmatprep.subr.mxu0 0.0
  %297 = vmatpush2.msra.mxu0 %v103
  %298 = vmatprep.subr.mxu0 0.0
  %299 = vmatpush2.msra.mxu0 %v102
  %300 = vmatprep.subr.mxu0 0.0
  %301 = vmatpush2.msra.mxu0 %v101
  %302 = vmatprep.subr.mxu0 0.0
  %303 = vmatpush2.msra.mxu0 %v100
  %304 = vmatprep.mubr.f32.mxu0 %v31
  %305 = vmatmul.mubr.f32.gmra.mxu0 %v30
  %v306 = vpop.f32.mrf.mxu0
  %v307 = vadd.f32 %v222, %v306
  %v308 = vpop.f32.mrf.mxu0
  %309 = vmatprep.mubr.f32.mxu0 %v37
  %310 = vmatmul.mubr.f32.gmra.mxu0 %v36
  %v311 = vpop.f32.mrf.mxu0
  %v312 = vadd.f32 %v227, %v311
  %v313 = vpop.f32.mrf.mxu0
  %314 = vmatprep.mubr.f32.mxu0 %v43
  %315 = vmatmul.mubr.f32.gmra.mxu0 %v42
  %v316 = vpop.f32.mrf.mxu0
  %v317 = vadd.f32 %v232, %v316
  %v318 = vpop.f32.mrf.mxu0
  %319 = vmatprep.mubr.f32.mxu0 %v49
  %320 = vmatmul.mubr.f32.gmra.mxu0 %v48
  %v321 = vpop.f32.mrf.mxu0
  %v322 = vadd.f32 %v237, %v321
  %v323 = vpop.f32.mrf.mxu0
  %324 = vdwg.mxu0
  %325 = vmatprep.subr.mxu0 0.0
  %326 = vmatpush1.msra.mxu0 %v131
  %327 = vmatprep.subr.mxu0 0.0
  %328 = vmatpush1.msra.mxu0 %v130
  %329 = vmatprep.subr.mxu0 0.0
  %330 = vmatpush1.msra.mxu0 %v129
  %331 = vmatprep.subr.mxu0 0.0
  %332 = vmatpush1.msra.mxu0 %v128
  %333 = vmatprep.subr.mxu0 0.0
  %334 = vmatpush1.msra.mxu0 %v127
  %335 = vmatprep.subr.mxu0 0.0
  %336 = vmatpush1.msra.mxu0 %v126
  %337 = vmatprep.subr.mxu0 0.0
  %338 = vmatpush1.msra.mxu0 %v125
  %339 = vmatprep.subr.mxu0 0.0
  %340 = vmatpush1.msra.mxu0 %v124
  %341 = vmatprep.subr.mxu0 0.0
  %342 = vmatpush1.msra.mxu0 %v123
  %343 = vmatprep.subr.mxu0 0.0
  %344 = vmatpush1.msra.mxu0 %v122
  %345 = vmatprep.subr.mxu0 0.0
  %346 = vmatpush1.msra.mxu0 %v121
  %347 = vmatprep.subr.mxu0 0.0
  %348 = vmatpush1.msra.mxu0 %v120
  %349 = vmatprep.subr.mxu0 0.0
  %350 = vmatpush1.msra.mxu0 %v119
  %351 = vmatprep.subr.mxu0 0.0
  %352 = vmatpush1.msra.mxu0 %v118
  %353 = vmatprep.subr.mxu0 0.0
  %354 = vmatpush1.msra.mxu0 %v117
  %355 = vmatprep.subr.mxu0 0.0
  %356 = vmatpush1.msra.mxu0 %v116
  %357 = vmatprep.subr.mxu0 0.0
  %358 = vmatpush2.msra.mxu0 %v147
  %359 = vmatprep.subr.mxu0 0.0
  %360 = vmatpush2.msra.mxu0 %v146
  %361 = vmatprep.subr.mxu0 0.0
  %362 = vmatpush2.msra.mxu0 %v145
  %363 = vmatprep.subr.mxu0 0.0
  %364 = vmatpush2.msra.mxu0 %v144
  %365 = vmatprep.subr.mxu0 0.0
  %366 = vmatpush2.msra.mxu0 %v143
  %367 = vmatprep.subr.mxu0 0.0
  %368 = vmatpush2.msra.mxu0 %v142
  %369 = vmatprep.subr.mxu0 0.0
  %370 = vmatpush2.msra.mxu0 %v141
  %371 = vmatprep.subr.mxu0 0.0
  %372 = vmatpush2.msra.mxu0 %v140
  %373 = vmatprep.subr.mxu0 0.0
  %374 = vmatpush2.msra.mxu0 %v139
  %375 = vmatprep.subr.mxu0 0.0
  %376 = vmatpush2.msra.mxu0 %v138
  %377 = vmatprep.subr.mxu0 0.0
  %378 = vmatpush2.msra.mxu0 %v137
  %379 = vmatprep.subr.mxu0 0.0
  %380 = vmatpush2.msra.mxu0 %v136
  %381 = vmatprep.subr.mxu0 0.0
  %382 = vmatpush2.msra.mxu0 %v135
  %383 = vmatprep.subr.mxu0 0.0
  %384 = vmatpush2.msra.mxu0 %v134
  %385 = vmatprep.subr.mxu0 0.0
  %386 = vmatpush2.msra.mxu0 %v133
  %387 = vmatprep.subr.mxu0 0.0
  %388 = vmatpush2.msra.mxu0 %v132
  %389 = vmatprep.mubr.f32.mxu0 %v33
  %390 = vmatmul.mubr.f32.gmra.mxu0 %v32
  %v391 = vpop.f32.mrf.mxu0
  %v392 = vadd.f32 %v307, %v391
  %v393 = vpop.f32.mrf.mxu0
  %394 = vmatprep.mubr.f32.mxu0 %v39
  %395 = vmatmul.mubr.f32.gmra.mxu0 %v38
  %v396 = vpop.f32.mrf.mxu0
  %v397 = vadd.f32 %v312, %v396
  %v398 = vpop.f32.mrf.mxu0
  %399 = vmatprep.mubr.f32.mxu0 %v45
  %400 = vmatmul.mubr.f32.gmra.mxu0 %v44
  %v401 = vpop.f32.mrf.mxu0
  %v402 = vadd.f32 %v317, %v401
  %v403 = vpop.f32.mrf.mxu0
  %404 = vmatprep.mubr.f32.mxu0 %v51
  %405 = vmatmul.mubr.f32.gmra.mxu0 %v50
  %v406 = vpop.f32.mrf.mxu0
  %v407 = vadd.f32 %v322, %v406
  %v408 = vpop.f32.mrf.mxu0
  %409 = vdwg.mxu0
  %vm410 = vcmp.ge.f32.partialorder %v392, 0.0
  %vm411 = vcmp.ge.f32.partialorder %v397, 0.0
  %vm412 = vcmp.ge.f32.partialorder %v402, 0.0
  %vm413 = vcmp.ge.f32.partialorder %v407, 0.0
  %v414 = vmul.f32 %v392, 0.2
  %v415 = vmul.f32 %v397, 0.2
  %v416 = vmul.f32 %v402, 0.2
  %v417 = vmul.f32 %v407, 0.2
  %v418 = vsel %vm410, %v392, %v414
  %v419 = vsel %vm411, %v397, %v415
  %v420 = vsel %vm412, %v402, %v416
  %v421 = vsel %vm413, %v407, %v417
  %v422 = vld [vmem:[%s3] sm:$0xff]
  %v423 = vld [vmem:[%s3 + $0x8] sm:$0xff]
  %v424 = vld [vmem:[%s3 + $0x10] sm:$0xff]
  %v425 = vld [vmem:[%s3 + $0x18] sm:$0xff]
  %v426 = vmul.f32 %v418, %v422
  %v427 = vmul.f32 %v419, %v423
  %v428 = vmul.f32 %v420, %v424
  %v429 = vmul.f32 %v421, %v425
  %v430 = vld [vmem:[%s5] sm:$0xff]
  %v431 = vld [vmem:[%s5 + $0x8] sm:$0xff]
  %v432 = vld [vmem:[%s5 + $0x10] sm:$0xff]
  %v433 = vld [vmem:[%s5 + $0x18] sm:$0xff]
  %v434 = vld [vmem:[%s5 + $0x20] sm:$0xff]
  %v435 = vld [vmem:[%s5 + $0x28] sm:$0xff]
  %v436 = vld [vmem:[%s5 + $0x30] sm:$0xff]
  %v437 = vld [vmem:[%s5 + $0x38] sm:$0xff]
  %vm438 = vcmask 523264
  %v440 = vsel %vm438, %v426, 0
  %v443 = vsel %vm438, %v427, 0
  %v446 = vsel %vm438, %v428, 0
  %v449 = vsel %vm438, %v429, 0
  %451 = vmatprep.subr.mxu0 0.0
  %452 = vmatpush1.msra.mxu0 0.0
  %453 = vmatprep.subr.mxu0 0.0
  %454 = vmatpush1.msra.mxu0 0.0
  %455 = vmatprep.subr.mxu0 0.0
  %456 = vmatpush1.msra.mxu0 0.0
  %457 = vmatprep.subr.mxu0 0.0
  %458 = vmatpush1.msra.mxu0 0.0
  %459 = vmatprep.subr.mxu0 0.0
  %460 = vmatpush1.msra.mxu0 0.0
  %461 = vmatprep.subr.mxu0 0.0
  %462 = vmatpush1.msra.mxu0 0.0
  %463 = vmatprep.subr.mxu0 0.0
  %464 = vmatpush1.msra.mxu0 0.0
  %465 = vmatprep.subr.mxu0 0.0
  %466 = vmatpush1.msra.mxu0 0.0
  %467 = vmatprep.subr.mxu0 0.0
  %468 = vmatpush1.msra.mxu0 %v437
  %469 = vmatprep.subr.mxu0 0.0
  %470 = vmatpush1.msra.mxu0 %v436
  %471 = vmatprep.subr.mxu0 0.0
  %472 = vmatpush1.msra.mxu0 %v435
  %473 = vmatprep.subr.mxu0 0.0
  %474 = vmatpush1.msra.mxu0 %v434
  %475 = vmatprep.subr.mxu0 0.0
  %476 = vmatpush1.msra.mxu0 %v433
  %477 = vmatprep.subr.mxu0 0.0
  %478 = vmatpush1.msra.mxu0 %v432
  %479 = vmatprep.subr.mxu0 0.0
  %480 = vmatpush1.msra.mxu0 %v431
  %481 = vmatprep.subr.mxu0 0.0
  %482 = vmatpush1.msra.mxu0 %v430
  %483 = vmatprep.subr.mxu0 0.0
  %484 = vmatpush2.msra.mxu0 0.0
  %485 = vmatprep.subr.mxu0 0.0
  %486 = vmatpush2.msra.mxu0 0.0
  %487 = vmatprep.subr.mxu0 0.0
  %488 = vmatpush2.msra.mxu0 0.0
  %489 = vmatprep.subr.mxu0 0.0
  %490 = vmatpush2.msra.mxu0 0.0
  %491 = vmatprep.subr.mxu0 0.0
  %492 = vmatpush2.msra.mxu0 0.0
  %493 = vmatprep.subr.mxu0 0.0
  %494 = vmatpush2.msra.mxu0 0.0
  %495 = vmatprep.subr.mxu0 0.0
  %496 = vmatpush2.msra.mxu0 0.0
  %497 = vmatprep.subr.mxu0 0.0
  %498 = vmatpush2.msra.mxu0 0.0
  %499 = vmatprep.subr.mxu0 0.0
  %500 = vmatpush2.msra.mxu0 0.0
  %501 = vmatprep.subr.mxu0 0.0
  %502 = vmatpush2.msra.mxu0 0.0
  %503 = vmatprep.subr.mxu0 0.0
  %504 = vmatpush2.msra.mxu0 0.0
  %505 = vmatprep.subr.mxu0 0.0
  %506 = vmatpush2.msra.mxu0 0.0
  %507 = vmatprep.subr.mxu0 0.0
  %508 = vmatpush2.msra.mxu0 0.0
  %509 = vmatprep.subr.mxu0 0.0
  %510 = vmatpush2.msra.mxu0 0.0
  %511 = vmatprep.subr.mxu0 0.0
  %512 = vmatpush2.msra.mxu0 0.0
  %513 = vmatprep.subr.mxu0 0.0
  %514 = vmatpush2.msra.mxu0 0.0
  %515 = vmatprep.mubr.f32.mxu0 0.0
  %516 = vmatmul.mubr.f32.gmra.mxu0 %v440
  %v517 = vpop.f32.mrf.mxu0
  %v518 = vadd.f32 0.0, %v517
  %v519 = vpop.f32.mrf.mxu0
  %520 = vmatprep.mubr.f32.mxu0 0.0
  %521 = vmatmul.mubr.f32.gmra.mxu0 %v443
  %v522 = vpop.f32.mrf.mxu0
  %v523 = vadd.f32 0.0, %v522
  %v524 = vpop.f32.mrf.mxu0
  %525 = vmatprep.mubr.f32.mxu0 0.0
  %526 = vmatmul.mubr.f32.gmra.mxu0 %v446
  %v527 = vpop.f32.mrf.mxu0
  %v528 = vadd.f32 0.0, %v527
  %v529 = vpop.f32.mrf.mxu0
  %530 = vmatprep.mubr.f32.mxu0 0.0
  %531 = vmatmul.mubr.f32.gmra.mxu0 %v449
  %v532 = vpop.f32.mrf.mxu0
  %v533 = vadd.f32 0.0, %v532
  %v534 = vpop.f32.mrf.mxu0
  %535 = vdwg.mxu0
  %v536 = vld [vmem:[%s4] sm:$0x3]
  %v537 = vld [vmem:[#allocation2] sm:$0x1]
  %v539 = vlaneseq
  %v540 = vshrl.u32 %v539, 7
  %v541 = vsub.s32 0, %v540
  %v542 = vrot.slane %v537, %v541
  %vm544 = vcmask 261120
  %v546 = vsel %vm544, %v536, 0
  %548 = vmatprep.subr.mxu0 0.0
  %549 = vmatpush1.msra.mxu0 0.0
  %550 = vmatprep.subr.mxu0 0.0
  %551 = vmatpush1.msra.mxu0 0.0
  %552 = vmatprep.subr.mxu0 0.0
  %553 = vmatpush1.msra.mxu0 0.0
  %554 = vmatprep.subr.mxu0 0.0
  %555 = vmatpush1.msra.mxu0 0.0
  %556 = vmatprep.subr.mxu0 0.0
  %557 = vmatpush1.msra.mxu0 0.0
  %558 = vmatprep.subr.mxu0 0.0
  %559 = vmatpush1.msra.mxu0 0.0
  %560 = vmatprep.subr.mxu0 0.0
  %561 = vmatpush1.msra.mxu0 0.0
  %562 = vmatprep.subr.mxu0 0.0
  %563 = vmatpush1.msra.mxu0 0.0
  %564 = vmatprep.subr.mxu0 0.0
  %565 = vmatpush1.msra.mxu0 0.0
  %566 = vmatprep.subr.mxu0 0.0
  %567 = vmatpush1.msra.mxu0 0.0
  %568 = vmatprep.subr.mxu0 0.0
  %569 = vmatpush1.msra.mxu0 0.0
  %570 = vmatprep.subr.mxu0 0.0
  %571 = vmatpush1.msra.mxu0 0.0
  %572 = vmatprep.subr.mxu0 0.0
  %573 = vmatpush1.msra.mxu0 %v533
  %574 = vmatprep.subr.mxu0 0.0
  %575 = vmatpush1.msra.mxu0 %v528
  %576 = vmatprep.subr.mxu0 0.0
  %577 = vmatpush1.msra.mxu0 %v523
  %578 = vmatprep.subr.mxu0 0.0
  %579 = vmatpush1.msra.mxu0 %v518
  %580 = vmatprep.subr.mxu0 0.0
  %581 = vmatpush2.msra.mxu0 0.0
  %582 = vmatprep.subr.mxu0 0.0
  %583 = vmatpush2.msra.mxu0 0.0
  %584 = vmatprep.subr.mxu0 0.0
  %585 = vmatpush2.msra.mxu0 0.0
  %586 = vmatprep.subr.mxu0 0.0
  %587 = vmatpush2.msra.mxu0 0.0
  %588 = vmatprep.subr.mxu0 0.0
  %589 = vmatpush2.msra.mxu0 0.0
  %590 = vmatprep.subr.mxu0 0.0
  %591 = vmatpush2.msra.mxu0 0.0
  %592 = vmatprep.subr.mxu0 0.0
  %593 = vmatpush2.msra.mxu0 0.0
  %594 = vmatprep.subr.mxu0 0.0
  %595 = vmatpush2.msra.mxu0 0.0
  %596 = vmatprep.subr.mxu0 0.0
  %597 = vmatpush2.msra.mxu0 0.0
  %598 = vmatprep.subr.mxu0 0.0
  %599 = vmatpush2.msra.mxu0 0.0
  %600 = vmatprep.subr.mxu0 0.0
  %601 = vmatpush2.msra.mxu0 0.0
  %602 = vmatprep.subr.mxu0 0.0
  %603 = vmatpush2.msra.mxu0 0.0
  %604 = vmatprep.subr.mxu0 0.0
  %605 = vmatpush2.msra.mxu0 0.0
  %606 = vmatprep.subr.mxu0 0.0
  %607 = vmatpush2.msra.mxu0 0.0
  %608 = vmatprep.subr.mxu0 0.0
  %609 = vmatpush2.msra.mxu0 0.0
  %610 = vmatprep.subr.mxu0 0.0
  %611 = vmatpush2.msra.mxu0 0.0
  %612 = vmatprep.mubr.f32.mxu0 0.0
  %613 = vmatmul.mubr.f32.gmra.mxu0 %v546
  %v614 = vpop.f32.mrf.mxu0
  %v615 = vadd.f32 %v542, %v614
  %v616 = vpop.f32.mrf.mxu0
  %617 = vdwg.mxu0
  %v618 = vxor.u32 %v615, 2147483648
  %v619 = vmul.f32 %v618, 1.442695
  %v620 = vpow.pop %v619
  %v621 = vadd.f32 %v620, 1.0
  %v622 = vrcp.pop %v621
  %v623 = vmul.f32 1.0, %v622
  %vm624 = vcmask 1024
  %625 = vst.msk [vmem:[%s7] sm:$0x3] %vm624, %v623
  // Predicated region
  $region30: #{d_get_logits_forward.1} parent=0 // pred_check
    _
  $region31: #{d_get_logits_forward.1} parent=0 // pred_check_branch
    %627 = sbr.rel (0) target = $region33
  $region32: #{d_get_logits_forward.1} parent=0 // pred_region
    _
  $region33: #{d_get_logits_forward.1} parent=0 // pred_fallthru
    _
  // Predicated region
  $region34: #{d_get_logits_forward.1} parent=0 // pred_check
    _
  $region35: #{d_get_logits_forward.1} parent=0 // pred_check_branch
    %629 = sbr.rel (0) target = $region37
  $region36: #{d_get_logits_forward.1} parent=0 // pred_region
    _
  $region37: #{d_get_logits_forward.1} parent=0 // pred_fallthru
    _

</llo_original>
